<compile_context>
chip_gen: v5e
topology: v5e:2x2
jax: 0.10.0
libtpu: 0.0.40
codegen_flags: <defaults>
</compile_context>

<pallas_src>
import jax
import jax.numpy as jnp
from jax.experimental import pallas as pl
from jax.experimental.pallas import tpu as pltpu


# ----------------------------- helpers -----------------------------

def _cdiv(a, b):
    return (a + b - 1) // b


def _round_up(x, m):
    return _cdiv(x, m) * m


def _vmem_limit_bytes():
    """Generation-aware VMEM limit: ~3/4 of physical, capped at 96 MiB."""
    cap = 64 << 20                      # conservative default (v7x physical)
    try:
        cap = int(pltpu.get_tpu_info().vmem_capacity_bytes)
    except Exception:
        pass
    # 96 MiB on 128-MiB parts (v5e/v6e), 48 MiB on 64-MiB parts (v7x).
    return max(32 << 20, min(cap * 3 // 4, 96 << 20))


def _pick_tiles(n, h_pad, vmem_limit, *, tile_n_max=1024, tile_k_max=512):
    """Pick (tile_n, n_row_tiles, tile_k, n_k_tiles) with near-minimal padding
    and a full-buffer-sum VMEM budget."""
    # K (A-column / contraction) tile: multiple of 128, balanced over N.
    nkt = max(1, _cdiv(n, tile_k_max))
    tile_k = _round_up(_cdiv(n, nkt), 128)

    # Row tile from the *total* VMEM footprint (not just the A slab):
    budget = int(vmem_limit * 0.6)                    # headroom for internals
    fixed = 2 * tile_k * h_pad * 2 + 2 * 8 * 128 * 4  # XW double-buf + bias
    per_row = (2 * tile_k * 1         # A int8 slab, double buffered
               + 3 * h_pad * 4        # out tile (x2) + f32 accumulator (x1)
               + 2 * 128 * 4)         # lane-padded (tile_n,1) d_row, x2
    t = (budget - fixed) // per_row
    t = max(32, min(tile_n_max, (t // 32) * 32))      # int8 sublane packing
    t = min(t, _round_up(n, 32))

    # Balance row tiles so the padding waste is < 32 rows per tile.
    nrt = max(1, _cdiv(n, t))
    tile_n = _round_up(_cdiv(n, nrt), 32)
    return int(tile_n), int(nrt), int(tile_k), int(nkt)


# ----------------------------- Pallas kernel -----------------------------

def _gcn_agg_kernel(a_ref, xw_ref, d_ref, b_ref, o_ref, acc_ref):
    # a_ref : (tile_n, tile_k) int8   -- A_hat row/col slab (exact counts)
    # xw_ref: (tile_k, H_pad)  bf16   -- D^{-1/2}-scaled XW slab
    # d_ref : (tile_n, 1)      f32    -- row D^{-1/2}
    # b_ref : (1, H_pad)       f32    -- bias
    # o_ref : (tile_n, H_pad)  f32
    # acc_ref: (tile_n, H_pad) f32 scratch accumulator
    k = pl.program_id(1)

    @pl.when(k == 0)
    def _init():
        acc_ref[...] = jnp.zeros_like(acc_ref)

    a = a_ref[...].astype(jnp.bfloat16)   # VPU cast, hidden under the A DMA
    acc_ref[...] += jnp.dot(a, xw_ref[...], preferred_element_type=jnp.float32)

    @pl.when(k == pl.num_programs(1) - 1)
    def _finalize():
        o_ref[...] = (d_ref[...] * acc_ref[...] + b_ref[...]).astype(o_ref.dtype)


def gcn_forward(a_hat_i8, d_inv_sqrt, x, w, b):
    """out = D^{-1/2} A_hat D^{-1/2} (X W) + b   via a K-tiled Pallas matmul."""
    n = a_hat_i8.shape[0]
    h = w.shape[1]
    h_pad = _round_up(max(h, 128), 128)          # lane-dense output, no vst.msk

    vmem_limit = _vmem_limit_bytes()
    tile_n, nrt, tile_k, nkt = _pick_tiles(n, h_pad, vmem_limit)
    n_rows = nrt * tile_n
    k_pad = nkt * tile_k

    # X @ W computed once in plain JAX (K = nfeat is tiny); fold the column
    # D^{-1/2} scale into XW rows.  bf16 storage, f32 accumulate in the kernel.
    xw = (x.astype(jnp.float32) @ w.astype(jnp.float32)) * d_inv_sqrt[:, None]
    xw_p = jnp.zeros((k_pad, h_pad), jnp.bfloat16).at[:n, :h].set(
        xw.astype(jnp.bfloat16))
    a_p = jnp.zeros((n_rows, k_pad), jnp.int8).at[:n, :n].set(a_hat_i8)
    d_p = jnp.zeros((n_rows, 1), jnp.float32).at[:n, 0].set(d_inv_sqrt)
    b_p = jnp.zeros((1, h_pad), jnp.float32).at[:, :h].set(
        jnp.asarray(b, jnp.float32).reshape(1, -1))

    flops = 2 * n_rows * k_pad * h_pad
    bytes_accessed = (n_rows * k_pad                 # int8 A stream (dominant)
                      + nrt * k_pad * h_pad * 2      # XW re-streamed per row tile
                      + n_rows * h_pad * 4           # output writeback
                      + n_rows * 4 + h_pad * 4)      # d_row + bias

    out_p = pl.pallas_call(
        _gcn_agg_kernel,
        out_shape=jax.ShapeDtypeStruct((n_rows, h_pad), jnp.float32),
        grid_spec=pltpu.PrefetchScalarGridSpec(
            num_scalar_prefetch=0,
            grid=(nrt, nkt),
            in_specs=[
                pl.BlockSpec((tile_n, tile_k), lambda i, k: (i, k)),  # A slab
                pl.BlockSpec((tile_k, h_pad), lambda i, k: (k, 0)),   # XW slab
                pl.BlockSpec((tile_n, 1), lambda i, k: (i, 0)),       # row scale
                pl.BlockSpec((1, h_pad), lambda i, k: (0, 0)),        # bias
            ],
            out_specs=pl.BlockSpec((tile_n, h_pad), lambda i, k: (i, 0)),
            scratch_shapes=[pltpu.VMEM((tile_n, h_pad), jnp.float32)],
        ),
        compiler_params=pltpu.CompilerParams(
            dimension_semantics=("parallel", "arbitrary"),
            vmem_limit_bytes=vmem_limit),
        cost_estimate=pl.CostEstimate(
            flops=flops, transcendentals=0, bytes_accessed=bytes_accessed),
    )(a_p, xw_p, d_p, b_p)

    return out_p[:n, :h]


# ------------------------- plain-JAX glue (no hot path) -------------------------

def build_graph(edge_index, num_nodes):
    """Dense A_hat = A + I as int8 plus d_inv_sqrt = rowsum(A_hat)^{-1/2}.

    Duplicate edges accumulate counts > 1 (scatter-add), matching the in-file
    reference; deduplicate upstream if strict PyG parity on raw edge lists is
    required.  Keeping A_hat as small integers (int8) keeps it exact.
    """
    src = edge_index[0]
    dst = edge_index[1]
    a = jnp.zeros((num_nodes, num_nodes), jnp.float32)
    a = a.at[dst, src].add(1.0)                       # message flows src -> dst
    a = a + jnp.eye(num_nodes, dtype=jnp.float32)     # add self loops
    deg = a.sum(axis=1)
    d_inv_sqrt = jnp.where(deg > 0, 1.0 / jnp.sqrt(deg), 0.0)
    return a.astype(jnp.int8), d_inv_sqrt.astype(jnp.float32), a


def init_gcn_params(key, nfeat, nhid):
    # Glorot-uniform weight (as in PyG GCNConv), zero bias -- deterministic.
    limit = jnp.sqrt(6.0 / (nfeat + nhid))
    w = jax.random.uniform(key, (nfeat, nhid), jnp.float32, -limit, limit)
    b = jnp.zeros((1, nhid), jnp.float32)
    return w, b


class GCN:
    """JAX/Pallas equivalent of the PyTorch GCN (single GCNConv layer)."""

    def __init__(self, nfeat, nhid, dropout=0.5, key=jax.random.PRNGKey(0)):
        # dropout is unused in the reference forward pass.
        self.w, self.b = init_gcn_params(key, nfeat, nhid)

    def __call__(self, edge_index, x):
        a_hat_i8, d_inv_sqrt, _ = build_graph(edge_index, x.shape[0])
        return gcn_forward(a_hat_i8, d_inv_sqrt, x, self.w, self.b)


# ----------------------------------- main -----------------------------------

if __name__ == "__main__":
    key = jax.random.PRNGKey(0)
    k_edge, k_x, k_w = jax.random.split(key, 3)

    N = 128      # nodes
    E = 256      # edges
    NFEAT = 16
    NHID = 32

    # Deterministic synthetic graph + features.
    src = jax.random.randint(k_edge, (E,), 0, N, dtype=jnp.int32)
    dst = jax.random.randint(jax.random.fold_in(k_edge, 1), (E,), 0, N,
                             dtype=jnp.int32)
    # make it undirected like a typical GCN benchmark graph
    edge_index = jnp.stack([jnp.concatenate([src, dst]),
                            jnp.concatenate([dst, src])], axis=0)
    x = jax.random.normal(k_x, (N, NFEAT), jnp.float32)

    model = GCN(NFEAT, NHID, key=k_w)
    out = jax.block_until_ready(model(edge_index, x))

    # Pure-JAX f32 reference of the hot path (kernel uses bf16 XW with exact
    # int8 adjacency and f32 accumulation, so use a bf16-appropriate tolerance).
    _, d_ref, a_f32 = build_graph(edge_index, N)
    a_norm = d_ref[:, None] * a_f32 * d_ref[None, :]
    ref = a_norm @ (x @ model.w) + model.b
    assert out.shape == (N, NHID)
    max_err = float(jnp.max(jnp.abs(out - ref)))
    assert max_err < 5e-2, f"max abs err {max_err}"

    print("KERNEL_OK")
</pallas_src>

<mosaic_0001>
module attributes {stable_mosaic.version = 11 : i64} {
  func.func @_gcn_agg_kernel(%arg0: i32, %arg1: i32, %arg2: memref<128x128xi8, #tpu.memory_space<vmem>>, %arg3: memref<128x128xbf16, #tpu.memory_space<vmem>>, %arg4: memref<128x1xf32, #tpu.memory_space<vmem>>, %arg5: memref<1x128xf32, #tpu.memory_space<vmem>>, %arg6: memref<128x128xf32, #tpu.memory_space<vmem>>, %arg7: memref<128x128xf32, #tpu.memory_space<vmem>>) attributes {dimension_semantics = [#tpu.dimension_semantics<parallel>, #tpu.dimension_semantics<arbitrary>], iteration_bounds = array<i64: 1, 1>, scalar_prefetch = 0 : i64, scratch_operands = 1 : i64, tpu.core_type = #tpu.core_type<tc>, window_params = [{transform_indices = @transform_0, window_bounds = array<i64: 128, 128>}, {transform_indices = @transform_1, window_bounds = array<i64: 128, 128>}, {transform_indices = @transform_2, window_bounds = array<i64: 128, 1>}, {pipeline_mode = #tpu.pipeline_mode<synchronous>, transform_indices = @transform_3, window_bounds = array<i64: 1, 128>}, {transform_indices = @transform_4, window_bounds = array<i64: 128, 128>}]} {
    %c0_i32 = arith.constant 0 : i32
    %0 = arith.cmpi eq, %arg1, %c0_i32 : i32
    %1 = arith.extui %0 : i1 to i32
    %c0_i32_0 = arith.constant 0 : i32
    %2 = arith.cmpi ne, %1, %c0_i32_0 : i32
    scf.if %2 {
      %cst_10 = arith.constant 0.000000e+00 : f32
      %13 = vector.broadcast %cst_10 : f32 to vector<128x128xf32>
      %c0_11 = arith.constant 0 : index
      %c0_12 = arith.constant 0 : index
      %14 = vector.load %arg7[%c0_11, %c0_12] : memref<128x128xf32, #tpu.memory_space<vmem>>, vector<128x128xf32>
      tpu.vector_store %arg7[%c0_11, %c0_12], %13 {strides = array<i32>} : memref<128x128xf32, #tpu.memory_space<vmem>>, vector<128x128xf32>,
    } else {
    }
    %c0 = arith.constant 0 : index
    %c0_1 = arith.constant 0 : index
    %3 = vector.load %arg2[%c0, %c0_1] : memref<128x128xi8, #tpu.memory_space<vmem>>, vector<128x128xi8>
    %4 = arith.sitofp %3 : vector<128x128xi8> to vector<128x128xbf16>
    %c0_2 = arith.constant 0 : index
    %c0_3 = arith.constant 0 : index
    %5 = vector.load %arg7[%c0_2, %c0_3] : memref<128x128xf32, #tpu.memory_space<vmem>>, vector<128x128xf32>
    %c0_4 = arith.constant 0 : index
    %c0_5 = arith.constant 0 : index
    %6 = vector.load %arg3[%c0_4, %c0_5] : memref<128x128xbf16, #tpu.memory_space<vmem>>, vector<128x128xbf16>
    %cst = arith.constant dense<0.000000e+00> : vector<128x128xf32>
    %7 = tpu.matmul %4, %6, %cst {dimension_numbers = #tpu.dot_dimension_numbers<[1], [0], [0], [1], [0, 0, 1, 1], [], []>} : vector<128x128xbf16>, vector<128x128xbf16>, vector<128x128xf32> -> vector<128x128xf32>
    %8 = arith.addf %5, %7 : vector<128x128xf32>
    %c0_6 = arith.constant 0 : index
    %c0_7 = arith.constant 0 : index
    %9 = vector.load %arg7[%c0_6, %c0_7] : memref<128x128xf32, #tpu.memory_space<vmem>>, vector<128x128xf32>
    tpu.vector_store %arg7[%c0_6, %c0_7], %8 {strides = array<i32>} : memref<128x128xf32, #tpu.memory_space<vmem>>, vector<128x128xf32>,
    %c0_i32_8 = arith.constant 0 : i32
    %10 = arith.cmpi eq, %arg1, %c0_i32_8 : i32
    %11 = arith.extui %10 : i1 to i32
    %c0_i32_9 = arith.constant 0 : i32
    %12 = arith.cmpi ne, %11, %c0_i32_9 : i32
    scf.if %12 {
      %c0_10 = arith.constant 0 : index
      %c0_11 = arith.constant 0 : index
      %13 = vector.load %arg4[%c0_10, %c0_11] : memref<128x1xf32, #tpu.memory_space<vmem>>, vector<128x1xf32>
      %c0_12 = arith.constant 0 : index
      %c0_13 = arith.constant 0 : index
      %14 = vector.load %arg7[%c0_12, %c0_13] : memref<128x128xf32, #tpu.memory_space<vmem>>, vector<128x128xf32>
      %15 = vector.broadcast %13 : vector<128x1xf32> to vector<128x128xf32>
      %16 = arith.mulf %15, %14 : vector<128x128xf32>
      %c0_14 = arith.constant 0 : index
      %c0_15 = arith.constant 0 : index
      %17 = vector.load %arg5[%c0_14, %c0_15] : memref<1x128xf32, #tpu.memory_space<vmem>>, vector<1x128xf32>
      %18 = vector.broadcast %17 : vector<1x128xf32> to vector<128x128xf32>
      %19 = arith.addf %16, %18 : vector<128x128xf32>
      %c0_16 = arith.constant 0 : index
      %c0_17 = arith.constant 0 : index
      %20 = vector.load %arg6[%c0_16, %c0_17] : memref<128x128xf32, #tpu.memory_space<vmem>>, vector<128x128xf32>
      tpu.vector_store %arg6[%c0_16, %c0_17], %19 {strides = array<i32>} : memref<128x128xf32, #tpu.memory_space<vmem>>, vector<128x128xf32>,
    } else {
    }
    return
  }
  func.func @transform_0(%arg0: i32, %arg1: i32) -> (i32, i32) {
    %c0_i32 = arith.constant 0 : i32
    return %arg0, %arg1 : i32, i32
  }
  func.func @transform_1(%arg0: i32, %arg1: i32) -> (i32, i32) {
    %c0_i32 = arith.constant 0 : i32
    %c0_i32_0 = arith.constant 0 : i32
    return %arg1, %c0_i32 : i32, i32
  }
  func.func @transform_2(%arg0: i32, %arg1: i32) -> (i32, i32) {
    %c0_i32 = arith.constant 0 : i32
    %c0_i32_0 = arith.constant 0 : i32
    return %arg0, %c0_i32 : i32, i32
  }
  func.func @transform_3(%arg0: i32, %arg1: i32) -> (i32, i32) {
    %c0_i32 = arith.constant 0 : i32
    %c0_i32_0 = arith.constant 0 : i32
    %c0_i32_1 = arith.constant 0 : i32
    return %c0_i32, %c0_i32_0 : i32, i32
  }
  func.func @transform_4(%arg0: i32, %arg1: i32) -> (i32, i32) {
    %c0_i32 = arith.constant 0 : i32
    %c0_i32_0 = arith.constant 0 : i32
    return %arg0, %c0_i32 : i32, i32
  }
}

</mosaic_0001>

<llo_original>
// kernel: tpu_custom_call.1
$region0: #{tpu_custom_call.1}
  #allocation0 [shape = 'u32[]', space=smem, size = 0x4, offset = 0x4, fixed_abs, tag = 'smem constant byte address 0x4 - core index']
  #allocation1 [shape = 'u32[72,128]{1,0:T(1,128)}', space=vmem, size = 0x9000, scoped, tag = 'internal scratch']
  #allocation2 [shape = 'f32[128,128]{1,0:T(8,128)}', space=vmem, size = 0x10000, scoped, tag = 'scratch operand']
  %s0 = inlined_call_operand.vmem [shape: s8[128,128], index: 0, kind: input, shape index: {}]
  %s1 = inlined_call_operand.vmem [shape: bf16[128,128], index: 1, kind: input, shape index: {}]
  %s2 = inlined_call_operand.vmem [shape: f32[128,1], index: 2, kind: input, shape index: {}]
  %s3 = inlined_call_operand.vmem [shape: f32[1,128], index: 3, kind: input, shape index: {}]
  %s4 = inlined_call_operand.hbm [shape: f32[128,128], index: 4, kind: output, shape index: {}]
  %s5 = sld [smem:[#allocation0]]
  $region34: #{tpu_custom_call.1} parent=0
    _
  %s7 = ssub.s32 1, %s5
  %s8 = scalar_select 0, %s7, %s5
  $region1: #{tpu_custom_call.1} parent=0
    #allocation3 [shape = 'u8[65536]{0}', space=vmem, size = 0x10000, scoped, tag = 'output window, operand 0, single buffered']
    #allocation4 [shape = 's32[1]{0}', space=sflag, size = 0x4, scoped, tag = 'scoped memory for tpu_custom_call.1']
    %9 = vsyncpa [#allocation4], 0
    // Predicated region
    $region2: #{tpu_custom_call.1} parent=1 // pred_check
      _
    $region3: #{tpu_custom_call.1} parent=1 // pred_check_branch
      %11 = sbr.rel (0) target = $region5
    $region4: #{tpu_custom_call.1} parent=1 // pred_region
      _
    $region5: #{tpu_custom_call.1} parent=1 // pred_fallthru
      _
    // Predicated region
    $region6: #{tpu_custom_call.1} parent=1 // pred_check
      _
    $region7: #{tpu_custom_call.1} parent=1 // pred_check_branch
      %13 = sbr.rel (0) target = $region9
    $region8: #{tpu_custom_call.1} parent=1 // pred_region
      _
    $region9: #{tpu_custom_call.1} parent=1 // pred_fallthru
      _
    // Predicated region
    $region10: #{tpu_custom_call.1} parent=1 // pred_check
      _
    $region11: #{tpu_custom_call.1} parent=1 // pred_check_branch
      %15 = sbr.rel (0) target = $region13
    $region12: #{tpu_custom_call.1} parent=1 // pred_region
      _
    $region13: #{tpu_custom_call.1} parent=1 // pred_fallthru
      _
    // Predicated region
    $region14: #{tpu_custom_call.1} parent=1 // pred_check
      _
    $region15: #{tpu_custom_call.1} parent=1 // pred_check_branch
      %17 = sbr.rel (0) target = $region17
    $region16: #{tpu_custom_call.1} parent=1 // pred_region
      _
    $region17: #{tpu_custom_call.1} parent=1 // pred_fallthru
      _
    %p18 = scmp.eq.s32.totalorder 0, 0
    // Predicated region
    $region18: #{tpu_custom_call.1} parent=1 // pred_check
      %p19 = pneg %p18
    $region19: #{tpu_custom_call.1} parent=1 // pred_check_branch
      %21 = sbr.rel (%p19) target = $region21
    $region20: #{tpu_custom_call.1} parent=1 // pred_region
      %22 = vst [vmem:[#allocation2] sm:$0xff] 0.0
      %23 = vst [vmem:[#allocation2 + $0x8] sm:$0xff] 0.0
      %24 = vst [vmem:[#allocation2 + $0x10] sm:$0xff] 0.0
      %25 = vst [vmem:[#allocation2 + $0x18] sm:$0xff] 0.0
      %26 = vst [vmem:[#allocation2 + $0x20] sm:$0xff] 0.0
      %27 = vst [vmem:[#allocation2 + $0x28] sm:$0xff] 0.0
      %28 = vst [vmem:[#allocation2 + $0x30] sm:$0xff] 0.0
      %29 = vst [vmem:[#allocation2 + $0x38] sm:$0xff] 0.0
      %30 = vst [vmem:[#allocation2 + $0x40] sm:$0xff] 0.0
      %31 = vst [vmem:[#allocation2 + $0x48] sm:$0xff] 0.0
      %32 = vst [vmem:[#allocation2 + $0x50] sm:$0xff] 0.0
      %33 = vst [vmem:[#allocation2 + $0x58] sm:$0xff] 0.0
      %34 = vst [vmem:[#allocation2 + $0x60] sm:$0xff] 0.0
      %35 = vst [vmem:[#allocation2 + $0x68] sm:$0xff] 0.0
      %36 = vst [vmem:[#allocation2 + $0x70] sm:$0xff] 0.0
      %37 = vst [vmem:[#allocation2 + $0x78] sm:$0xff] 0.0
    $region21: #{tpu_custom_call.1} parent=1 // pred_fallthru
      _
    %v38 = vld [vmem:[%s0] sm:$0xff]
    %v39 = vld [vmem:[%s0 + $0x8] sm:$0xff]
    %v40 = vld [vmem:[%s0 + $0x10] sm:$0xff]
    %v41 = vld [vmem:[%s0 + $0x18] sm:$0xff]
    %v42 = vunpack.c.0.s8 %v38
    %v43 = vunpack.c.1.s8 %v38
    %v44 = vunpack.c.2.s8 %v38
    %v45 = vunpack.c.3.s8 %v38
    %v46 = vunpack.c.0.s8 %v39
    %v47 = vunpack.c.1.s8 %v39
    %v48 = vunpack.c.2.s8 %v39
    %v49 = vunpack.c.3.s8 %v39
    %v50 = vunpack.c.0.s8 %v40
    %v51 = vunpack.c.1.s8 %v40
    %v52 = vunpack.c.2.s8 %v40
    %v53 = vunpack.c.3.s8 %v40
    %v54 = vunpack.c.0.s8 %v41
    %v55 = vunpack.c.1.s8 %v41
    %v56 = vunpack.c.2.s8 %v41
    %v57 = vunpack.c.3.s8 %v41
    %v58 = vcvt.s32.f32 %v42
    %v59 = vcvt.s32.f32 %v43
    %v60 = vcvt.s32.f32 %v44
    %v61 = vcvt.s32.f32 %v45
    %v62 = vcvt.s32.f32 %v46
    %v63 = vcvt.s32.f32 %v47
    %v64 = vcvt.s32.f32 %v48
    %v65 = vcvt.s32.f32 %v49
    %v66 = vcvt.s32.f32 %v50
    %v67 = vcvt.s32.f32 %v51
    %v68 = vcvt.s32.f32 %v52
    %v69 = vcvt.s32.f32 %v53
    %v70 = vcvt.s32.f32 %v54
    %v71 = vcvt.s32.f32 %v55
    %v72 = vcvt.s32.f32 %v56
    %v73 = vcvt.s32.f32 %v57
    %v74 = vpack.c.bf16 %v59, %v58
    %v75 = vpack.c.bf16 %v61, %v60
    %v76 = vpack.c.bf16 %v63, %v62
    %v77 = vpack.c.bf16 %v65, %v64
    %v78 = vpack.c.bf16 %v67, %v66
    %v79 = vpack.c.bf16 %v69, %v68
    %v80 = vpack.c.bf16 %v71, %v70
    %v81 = vpack.c.bf16 %v73, %v72
    %v82 = vld [vmem:[#allocation2] sm:$0xff]
    %v83 = vld [vmem:[#allocation2 + $0x8] sm:$0xff]
    %v84 = vld [vmem:[#allocation2 + $0x10] sm:$0xff]
    %v85 = vld [vmem:[#allocation2 + $0x18] sm:$0xff]
    %v86 = vld [vmem:[#allocation2 + $0x20] sm:$0xff]
    %v87 = vld [vmem:[#allocation2 + $0x28] sm:$0xff]
    %v88 = vld [vmem:[#allocation2 + $0x30] sm:$0xff]
    %v89 = vld [vmem:[#allocation2 + $0x38] sm:$0xff]
    %v90 = vld [vmem:[#allocation2 + $0x40] sm:$0xff]
    %v91 = vld [vmem:[#allocation2 + $0x48] sm:$0xff]
    %v92 = vld [vmem:[#allocation2 + $0x50] sm:$0xff]
    %v93 = vld [vmem:[#allocation2 + $0x58] sm:$0xff]
    %v94 = vld [vmem:[#allocation2 + $0x60] sm:$0xff]
    %v95 = vld [vmem:[#allocation2 + $0x68] sm:$0xff]
    %v96 = vld [vmem:[#allocation2 + $0x70] sm:$0xff]
    %v97 = vld [vmem:[#allocation2 + $0x78] sm:$0xff]
    %v98 = vld [vmem:[%s1] sm:$0xf]
    %v99 = vld [vmem:[%s1 + $0x4] sm:$0xf]
    %v100 = vld [vmem:[%s1 + $0x8] sm:$0xf]
    %v101 = vld [vmem:[%s1 + $0xc] sm:$0xf]
    %v102 = vld [vmem:[%s1 + $0x10] sm:$0xf]
    %v103 = vld [vmem:[%s1 + $0x14] sm:$0xf]
    %v104 = vld [vmem:[%s1 + $0x18] sm:$0xf]
    %v105 = vld [vmem:[%s1 + $0x1c] sm:$0xf]
    %v106 = vld [vmem:[%s1 + $0x20] sm:$0xf]
    %v107 = vld [vmem:[%s1 + $0x24] sm:$0xf]
    %v108 = vld [vmem:[%s1 + $0x28] sm:$0xf]
    %v109 = vld [vmem:[%s1 + $0x2c] sm:$0xf]
    %v110 = vld [vmem:[%s1 + $0x30] sm:$0xf]
    %v111 = vld [vmem:[%s1 + $0x34] sm:$0xf]
    %v112 = vld [vmem:[%s1 + $0x38] sm:$0xf]
    %v113 = vld [vmem:[%s1 + $0x3c] sm:$0xf]
    %v130 = vunpack.c.l.b16 %v98
    %v131 = vunpack.c.l.b16 %v99
    %v132 = vunpack.c.l.b16 %v100
    %v133 = vunpack.c.l.b16 %v101
    %v134 = vunpack.c.l.b16 %v102
    %v135 = vunpack.c.l.b16 %v103
    %v136 = vunpack.c.l.b16 %v104
    %v137 = vunpack.c.l.b16 %v105
    %v138 = vunpack.c.l.b16 %v106
    %v139 = vunpack.c.l.b16 %v107
    %v140 = vunpack.c.l.b16 %v108
    %v141 = vunpack.c.l.b16 %v109
    %v142 = vunpack.c.l.b16 %v110
    %v143 = vunpack.c.l.b16 %v111
    %v144 = vunpack.c.l.b16 %v112
    %v145 = vunpack.c.l.b16 %v113
    %v146 = vpack.c.b16 %v131, %v130
    %v147 = vpack.c.b16 %v133, %v132
    %v148 = vpack.c.b16 %v135, %v134
    %v149 = vpack.c.b16 %v137, %v136
    %v150 = vpack.c.b16 %v139, %v138
    %v151 = vpack.c.b16 %v141, %v140
    %v152 = vpack.c.b16 %v143, %v142
    %v153 = vpack.c.b16 %v145, %v144
    %162 = vmatpush.bf16.msra.mxu0 %v153
    %163 = vmatpush.bf16.msra.mxu0 %v152
    %164 = vmatpush.bf16.msra.mxu0 %v151
    %165 = vmatpush.bf16.msra.mxu0 %v150
    %166 = vmatpush.bf16.msra.mxu0 %v149
    %167 = vmatpush.bf16.msra.mxu0 %v148
    %168 = vmatpush.bf16.msra.mxu0 %v147
    %169 = vmatpush.bf16.msra.mxu0 %v146
    %170 = vmatmul.bf16.gmra.mxu0 %v74
    %v171 = vpop.f32.mrf.mxu0
    %v172 = vadd.f32 0.0, %v171
    %v173 = vpop.f32.mrf.mxu0
    %v174 = vadd.f32 0.0, %v173
    %175 = vmatmul.bf16.gmra.mxu0 %v75
    %v176 = vpop.f32.mrf.mxu0
    %v177 = vadd.f32 0.0, %v176
    %v178 = vpop.f32.mrf.mxu0
    %v179 = vadd.f32 0.0, %v178
    %180 = vmatmul.bf16.gmra.mxu0 %v76
    %v181 = vpop.f32.mrf.mxu0
    %v182 = vadd.f32 0.0, %v181
    %v183 = vpop.f32.mrf.mxu0
    %v184 = vadd.f32 0.0, %v183
    %185 = vmatmul.bf16.gmra.mxu0 %v77
    %v186 = vpop.f32.mrf.mxu0
    %v187 = vadd.f32 0.0, %v186
    %v188 = vpop.f32.mrf.mxu0
    %v189 = vadd.f32 0.0, %v188
    %190 = vmatmul.bf16.gmra.mxu0 %v78
    %v191 = vpop.f32.mrf.mxu0
    %v192 = vadd.f32 0.0, %v191
    %v193 = vpop.f32.mrf.mxu0
    %v194 = vadd.f32 0.0, %v193
    %195 = vmatmul.bf16.gmra.mxu0 %v79
    %v196 = vpop.f32.mrf.mxu0
    %v197 = vadd.f32 0.0, %v196
    %v198 = vpop.f32.mrf.mxu0
    %v199 = vadd.f32 0.0, %v198
    %200 = vmatmul.bf16.gmra.mxu0 %v80
    %v201 = vpop.f32.mrf.mxu0
    %v202 = vadd.f32 0.0, %v201
    %v203 = vpop.f32.mrf.mxu0
    %v204 = vadd.f32 0.0, %v203
    %205 = vmatmul.bf16.gmra.mxu0 %v81
    %v206 = vpop.f32.mrf.mxu0
    %v207 = vadd.f32 0.0, %v206
    %v208 = vpop.f32.mrf.mxu0
    %v209 = vadd.f32 0.0, %v208
    %210 = vdwg.mxu0
    %v211 = vadd.f32 %v82, %v172
    %v212 = vadd.f32 %v83, %v174
    %v213 = vadd.f32 %v84, %v177
    %v214 = vadd.f32 %v85, %v179
    %v215 = vadd.f32 %v86, %v182
    %v216 = vadd.f32 %v87, %v184
    %v217 = vadd.f32 %v88, %v187
    %v218 = vadd.f32 %v89, %v189
    %v219 = vadd.f32 %v90, %v192
    %v220 = vadd.f32 %v91, %v194
    %v221 = vadd.f32 %v92, %v197
    %v222 = vadd.f32 %v93, %v199
    %v223 = vadd.f32 %v94, %v202
    %v224 = vadd.f32 %v95, %v204
    %v225 = vadd.f32 %v96, %v207
    %v226 = vadd.f32 %v97, %v209
    %227 = vst [vmem:[#allocation2] sm:$0xff] %v211
    %228 = vst [vmem:[#allocation2 + $0x8] sm:$0xff] %v212
    %229 = vst [vmem:[#allocation2 + $0x10] sm:$0xff] %v213
    %230 = vst [vmem:[#allocation2 + $0x18] sm:$0xff] %v214
    %231 = vst [vmem:[#allocation2 + $0x20] sm:$0xff] %v215
    %232 = vst [vmem:[#allocation2 + $0x28] sm:$0xff] %v216
    %233 = vst [vmem:[#allocation2 + $0x30] sm:$0xff] %v217
    %234 = vst [vmem:[#allocation2 + $0x38] sm:$0xff] %v218
    %235 = vst [vmem:[#allocation2 + $0x40] sm:$0xff] %v219
    %236 = vst [vmem:[#allocation2 + $0x48] sm:$0xff] %v220
    %237 = vst [vmem:[#allocation2 + $0x50] sm:$0xff] %v221
    %238 = vst [vmem:[#allocation2 + $0x58] sm:$0xff] %v222
    %239 = vst [vmem:[#allocation2 + $0x60] sm:$0xff] %v223
    %240 = vst [vmem:[#allocation2 + $0x68] sm:$0xff] %v224
    %241 = vst [vmem:[#allocation2 + $0x70] sm:$0xff] %v225
    %242 = vst [vmem:[#allocation2 + $0x78] sm:$0xff] %v226
    // Predicated region
    $region22: #{tpu_custom_call.1} parent=1 // pred_check
      %p243 = pneg %p18
    $region23: #{tpu_custom_call.1} parent=1 // pred_check_branch
      %245 = sbr.rel (%p243) target = $region25
    $region24: #{tpu_custom_call.1} parent=1 // pred_region
      %v246 = vld [vmem:[%s2] sm:$0xff]
      %v247 = vld [vmem:[%s2 + $0x8] sm:$0xff]
      %v248 = vld [vmem:[%s2 + $0x10] sm:$0xff]
      %v249 = vld [vmem:[%s2 + $0x18] sm:$0xff]
      %v250 = vld [vmem:[%s2 + $0x20] sm:$0xff]
      %v251 = vld [vmem:[%s2 + $0x28] sm:$0xff]
      %v252 = vld [vmem:[%s2 + $0x30] sm:$0xff]
      %v253 = vld [vmem:[%s2 + $0x38] sm:$0xff]
      %v254 = vld [vmem:[%s2 + $0x40] sm:$0xff]
      %v255 = vld [vmem:[%s2 + $0x48] sm:$0xff]
      %v256 = vld [vmem:[%s2 + $0x50] sm:$0xff]
      %v257 = vld [vmem:[%s2 + $0x58] sm:$0xff]
      %v258 = vld [vmem:[%s2 + $0x60] sm:$0xff]
      %v259 = vld [vmem:[%s2 + $0x68] sm:$0xff]
      %v260 = vld [vmem:[%s2 + $0x70] sm:$0xff]
      %v261 = vld [vmem:[%s2 + $0x78] sm:$0xff]
      %v262 = vld [vmem:[#allocation2] sm:$0xff]
      %v263 = vld [vmem:[#allocation2 + $0x8] sm:$0xff]
      %v264 = vld [vmem:[#allocation2 + $0x10] sm:$0xff]
      %v265 = vld [vmem:[#allocation2 + $0x18] sm:$0xff]
      %v266 = vld [vmem:[#allocation2 + $0x20] sm:$0xff]
      %v267 = vld [vmem:[#allocation2 + $0x28] sm:$0xff]
      %v268 = vld [vmem:[#allocation2 + $0x30] sm:$0xff]
      %v269 = vld [vmem:[#allocation2 + $0x38] sm:$0xff]
      %v270 = vld [vmem:[#allocation2 + $0x40] sm:$0xff]
      %v271 = vld [vmem:[#allocation2 + $0x48] sm:$0xff]
      %v272 = vld [vmem:[#allocation2 + $0x50] sm:$0xff]
      %v273 = vld [vmem:[#allocation2 + $0x58] sm:$0xff]
      %v274 = vld [vmem:[#allocation2 + $0x60] sm:$0xff]
      %v275 = vld [vmem:[#allocation2 + $0x68] sm:$0xff]
      %v276 = vld [vmem:[#allocation2 + $0x70] sm:$0xff]
      %v277 = vld [vmem:[#allocation2 + $0x78] sm:$0xff]
      %279 = vset.pattern.permute.xlu0 0
      %280 = vperm.xlu0 %279, %v246
      %v281 = vpop.permute.xlu0 %280
      %284 = vset.pattern.permute.xlu0 0
      %285 = vperm.xlu0 %284, %v247
      %v286 = vpop.permute.xlu0 %285
      %289 = vset.pattern.permute.xlu0 0
      %290 = vperm.xlu0 %289, %v248
      %v291 = vpop.permute.xlu0 %290
      %294 = vset.pattern.permute.xlu0 0
      %295 = vperm.xlu0 %294, %v249
      %v296 = vpop.permute.xlu0 %295
      %299 = vset.pattern.permute.xlu0 0
      %300 = vperm.xlu0 %299, %v250
      %v301 = vpop.permute.xlu0 %300
      %304 = vset.pattern.permute.xlu0 0
      %305 = vperm.xlu0 %304, %v251
      %v306 = vpop.permute.xlu0 %305
      %309 = vset.pattern.permute.xlu0 0
      %310 = vperm.xlu0 %309, %v252
      %v311 = vpop.permute.xlu0 %310
      %314 = vset.pattern.permute.xlu0 0
      %315 = vperm.xlu0 %314, %v253
      %v316 = vpop.permute.xlu0 %315
      %319 = vset.pattern.permute.xlu0 0
      %320 = vperm.xlu0 %319, %v254
      %v321 = vpop.permute.xlu0 %320
      %324 = vset.pattern.permute.xlu0 0
      %325 = vperm.xlu0 %324, %v255
      %v326 = vpop.permute.xlu0 %325
      %329 = vset.pattern.permute.xlu0 0
      %330 = vperm.xlu0 %329, %v256
      %v331 = vpop.permute.xlu0 %330
      %334 = vset.pattern.permute.xlu0 0
      %335 = vperm.xlu0 %334, %v257
      %v336 = vpop.permute.xlu0 %335
      %339 = vset.pattern.permute.xlu0 0
      %340 = vperm.xlu0 %339, %v258
      %v341 = vpop.permute.xlu0 %340
      %344 = vset.pattern.permute.xlu0 0
      %345 = vperm.xlu0 %344, %v259
      %v346 = vpop.permute.xlu0 %345
      %349 = vset.pattern.permute.xlu0 0
      %350 = vperm.xlu0 %349, %v260
      %v351 = vpop.permute.xlu0 %350
      %354 = vset.pattern.permute.xlu0 0
      %355 = vperm.xlu0 %354, %v261
      %v356 = vpop.permute.xlu0 %355
      %v358 = vmul.f32 %v281, %v262
      %v359 = vmul.f32 %v286, %v263
      %v360 = vmul.f32 %v291, %v264
      %v361 = vmul.f32 %v296, %v265
      %v362 = vmul.f32 %v301, %v266
      %v363 = vmul.f32 %v306, %v267
      %v364 = vmul.f32 %v311, %v268
      %v365 = vmul.f32 %v316, %v269
      %v366 = vmul.f32 %v321, %v270
      %v367 = vmul.f32 %v326, %v271
      %v368 = vmul.f32 %v331, %v272
      %v369 = vmul.f32 %v336, %v273
      %v370 = vmul.f32 %v341, %v274
      %v371 = vmul.f32 %v346, %v275
      %v372 = vmul.f32 %v351, %v276
      %v373 = vmul.f32 %v356, %v277
      %v374 = vld [vmem:[%s3] sm:$0x1]
      %v376 = vperm.slane %v374, 0
      %v378 = vadd.f32 %v358, %v376
      %v379 = vadd.f32 %v359, %v376
      %v380 = vadd.f32 %v360, %v376
      %v381 = vadd.f32 %v361, %v376
      %v382 = vadd.f32 %v362, %v376
      %v383 = vadd.f32 %v363, %v376
      %v384 = vadd.f32 %v364, %v376
      %v385 = vadd.f32 %v365, %v376
      %v386 = vadd.f32 %v366, %v376
      %v387 = vadd.f32 %v367, %v376
      %v388 = vadd.f32 %v368, %v376
      %v389 = vadd.f32 %v369, %v376
      %v390 = vadd.f32 %v370, %v376
      %v391 = vadd.f32 %v371, %v376
      %v392 = vadd.f32 %v372, %v376
      %v393 = vadd.f32 %v373, %v376
      %394 = vst [vmem:[#allocation3] sm:$0xff] %v378
      %395 = vst [vmem:[#allocation3 + $0x8] sm:$0xff] %v379
      %396 = vst [vmem:[#allocation3 + $0x10] sm:$0xff] %v380
      %397 = vst [vmem:[#allocation3 + $0x18] sm:$0xff] %v381
      %398 = vst [vmem:[#allocation3 + $0x20] sm:$0xff] %v382
      %399 = vst [vmem:[#allocation3 + $0x28] sm:$0xff] %v383
      %400 = vst [vmem:[#allocation3 + $0x30] sm:$0xff] %v384
      %401 = vst [vmem:[#allocation3 + $0x38] sm:$0xff] %v385
      %402 = vst [vmem:[#allocation3 + $0x40] sm:$0xff] %v386
      %403 = vst [vmem:[#allocation3 + $0x48] sm:$0xff] %v387
      %404 = vst [vmem:[#allocation3 + $0x50] sm:$0xff] %v388
      %405 = vst [vmem:[#allocation3 + $0x58] sm:$0xff] %v389
      %406 = vst [vmem:[#allocation3 + $0x60] sm:$0xff] %v390
      %407 = vst [vmem:[#allocation3 + $0x68] sm:$0xff] %v391
      %408 = vst [vmem:[#allocation3 + $0x70] sm:$0xff] %v392
      %409 = vst [vmem:[#allocation3 + $0x78] sm:$0xff] %v393
    $region25: #{tpu_custom_call.1} parent=1 // pred_fallthru
      _
    // Predicated region
    $region26: #{tpu_custom_call.1} parent=1 // pred_check
      _
    $region27: #{tpu_custom_call.1} parent=1 // pred_check_branch
      %411 = sbr.rel (0) target = $region29
    $region28: #{tpu_custom_call.1} parent=1 // pred_region
      %413 = vsyncadd [#allocation4], 0
      %s414 = sshll.u32 [#allocation3], 4
      %s415 = int_to_ptr.vmem [resolvable:$true] %s414
      %s416 = sshll.u32 %s4, 4
      %s417 = int_to_ptr.hbm [resolvable:$true] %s416
      %422 = dma.vmem_to_hbm [thread:$0]  %s415, 2048, %s417, [#allocation4], 128, 128, 8
    $region29: #{tpu_custom_call.1} parent=1 // pred_fallthru
      _
    // Predicated region
    $region30: #{tpu_custom_call.1} parent=1 // pred_check
      _
    $region31: #{tpu_custom_call.1} parent=1 // pred_check_branch
      %424 = sbr.rel (0) target = $region33
    $region32: #{tpu_custom_call.1} parent=1 // pred_region
      %426 = dma.done [#allocation4], 2048
    $region33: #{tpu_custom_call.1} parent=1 // pred_fallthru
      _
    %427 = vsyncpa [#allocation4], 1

</llo_original>
